<compile_context>
chip_gen: v7x
topology: tpu7x:2x2x1
jax: 0.10.0
libtpu: 0.0.40
codegen_flags: <defaults>
</compile_context>

<pallas_src>
import functools

import numpy as np
import jax
import jax.numpy as jnp
from jax.experimental import pallas as pl
from jax.experimental.pallas import tpu as pltpu

OVERLAP = 0.0   # module defaults
TOP_K = 200
KEEP_K = 200

_LANE = 128     # query padding granularity (lane width)
_UNROLL = 4     # greedy selections per early-exit check


def _choose_batch_tile(batch, qp):
    """Batch rows per grid step (multiple of 8 sublanes).

    The greedy loop is XLU-latency bound over a single lane-dense block, so we
    carry as many independent batch rows as the vreg budget allows (~5 carried
    lane-dense arrays at (BT/8)*(QP/128) vregs each -> cap ~20 at QP=128) and
    never scale BT and QP together.  Grid is kept >= 2 whenever the batch
    spans more than one sublane group so v7x's second TensorCore has work
    (no effect on single-TC v5e/v6e).
    """
    bt = max(8, min(32, ((32 * 128) // qp) // 8 * 8))
    b_pad8 = -(-batch // 8) * 8
    bt = min(bt, b_pad8)                          # don't over-pad tiny batches
    if b_pad8 > 8:
        groups = b_pad8 // 8
        bt = min(bt, -(-groups // 2) * 8)         # keep >= 2 grid steps (v7x)
    return bt


def _nms_kernel(scores_ref, x1_ref, x2_ref, keep_ref, *,
                overlap, q_valid, b_valid, top_k, unroll):
    # scores_ref/x1_ref/x2_ref: (BT, QP) f32     keep_ref: (BT, QP) i32
    BT, QP = scores_ref.shape
    neg_inf = jnp.float32(-jnp.inf)
    overlap_f = jnp.float32(overlap)

    q_iota = jax.lax.broadcasted_iota(jnp.int32, (BT, QP), 1)   # query idx / lane
    b_iota = jax.lax.broadcasted_iota(jnp.int32, (BT, 1), 0)    # row idx / sublane

    # Fold padded query columns and padded batch rows into the score carry as
    # -inf (no separate "active" array).
    row_ok = (pl.program_id(0) * BT + b_iota) < b_valid          # (BT, 1)
    col_ok = q_iota < q_valid                                    # (BT, QP)
    masked0 = jnp.where(col_ok & row_ok, scores_ref[...], neg_inf)

    x1 = x1_ref[...]                                             # (BT, QP)
    x2 = x2_ref[...]                                             # (BT, QP)
    xs = jnp.stack([x1, x2])        # (2, BT, QP) — hoisted; one fused gather/iter

    # TODO(synk): restricting the candidate pool to the top_k highest-scoring
    # queries is a no-op whenever Q <= top_k (true for the module defaults:
    # 100 queries, top_k=200); the general Q > top_k case is not implemented.
    max_iters = min(int(q_valid), int(top_k))

    def select_one(masked, keep_vec, count):
        # Per-row max of still-active scores; a row with mval == -inf is done.
        mval = jnp.max(masked, axis=-1, keepdims=True)           # (BT,1) reduce 1
        row_active = mval > neg_inf                              # (BT,1)
        # Arg-max with LARGEST-index tie-break (matches stable ascending sort
        # followed by idx[-1] in the reference).
        best = jnp.max(jnp.where(masked == mval, q_iota, -1),
                       axis=-1, keepdims=True)                   # (BT,1) reduce 2
        is_best = q_iota == best                                 # (BT,QP)
        # Fused coordinate gather of the kept segment (x1_i, x2_i together).
        xi = jnp.max(jnp.where(is_best[None], xs, neg_inf),
                     axis=-1, keepdims=True)                     # (2,BT,1) reduce 3
        x1_i, x2_i = xi[0], xi[1]                                # (BT,1) each
        # 1-D intersection with the kept segment.
        inter = jnp.maximum(jnp.minimum(x2, x2_i) - jnp.maximum(x1, x1_i), 0.0)
        suppress = (inter > overlap_f) | is_best                 # (BT,QP)
        masked = jnp.where(suppress & row_active, neg_inf, masked)
        keep_vec = jnp.where((q_iota == count) & row_active, best, keep_vec)
        count = count + row_active.astype(jnp.int32)
        return masked, keep_vec, count, row_active

    def cond(carry):
        step, cont, _, _, _ = carry
        return (cont > 0) & (step < max_iters)

    def body(carry):
        step, _, masked, keep_vec, count = carry
        row_active = None
        for _ in range(unroll):          # unrolled; a finished row is a no-op
            masked, keep_vec, count, row_active = select_one(masked, keep_vec, count)
        # One vreg->sreg early-exit check per group of `unroll` selections.
        cont = jnp.any(row_active).astype(jnp.int32)
        return step + unroll, cont, masked, keep_vec, count

    carry0 = (jnp.int32(0), jnp.int32(1), masked0,
              jnp.zeros((BT, QP), jnp.int32), jnp.zeros((BT, 1), jnp.int32))
    _, _, _, keep_vec, _ = jax.lax.while_loop(cond, body, carry0)

    keep_ref[...] = keep_vec                                     # lane-dense store


@functools.partial(jax.jit, static_argnames=("overlap", "top_k"))
def nms_keep_slots(pred_logits, pred_segments, overlap=OVERLAP, top_k=TOP_K):
    """Runs the Pallas kernel. Returns (B, Q) int32 keep-slot vectors."""
    B, Q, _C = pred_logits.shape
    QP = -(-Q // _LANE) * _LANE
    BT = _choose_batch_tile(B, QP)
    BP = -(-B // BT) * BT

    # score = max(softmax(logits, -1)) = 1 / sum(exp(l - max_c l)): computed in
    # plain XLA on the natural (B,Q,C) layout (no HBM relayout of the big
    # tensor); the kernel only sees three lane-dense (B, Q) planes.
    lg = pred_logits.astype(jnp.float32)
    m = jnp.max(lg, axis=-1, keepdims=True)
    scores = 1.0 / jnp.sum(jnp.exp(lg - m), axis=-1)             # (B, Q)
    sg = pred_segments.astype(jnp.float32)
    x1, x2 = sg[..., 0], sg[..., 1]                              # (B, Q) each

    pad = lambda a: jnp.pad(a, ((0, BP - B), (0, QP - Q)))
    scores_p, x1_p, x2_p = pad(scores), pad(x1), pad(x2)

    kernel = functools.partial(_nms_kernel, overlap=float(overlap),
                               q_valid=int(Q), b_valid=int(B),
                               top_k=int(top_k), unroll=_UNROLL)
    keep = pl.pallas_call(
        kernel,
        out_shape=jax.ShapeDtypeStruct((BP, QP), jnp.int32),
        grid=(BP // BT,),
        in_specs=[pl.BlockSpec((BT, QP), lambda b: (b, 0)),
                  pl.BlockSpec((BT, QP), lambda b: (b, 0)),
                  pl.BlockSpec((BT, QP), lambda b: (b, 0))],
        out_specs=pl.BlockSpec((BT, QP), lambda b: (b, 0)),
        compiler_params=pltpu.CompilerParams(dimension_semantics=("parallel",)),
    )(scores_p, x1_p, x2_p)
    return keep[:B, :Q]


def nms_v1_forward(outputs, overlap=OVERLAP, top_k=TOP_K, keep_k=KEEP_K):
    """Full NMS_v1.forward semantics (kernel + host-side ragged glue)."""
    keep_slots = nms_keep_slots(outputs["pred_logits"], outputs["pred_segments"],
                                overlap=overlap, top_k=top_k)
    keep_slots = np.asarray(jax.block_until_ready(keep_slots))

    # Ragged part of the torch forward (dynamic shapes -> host-side numpy).
    # Note: like the reference, `keep[keep > 0]` cannot distinguish "query 0
    # was kept" from "empty slot" — this mirrors the torch module's behavior.
    keep_list = []
    for b in range(keep_slots.shape[0]):
        kb = keep_slots[b]
        kb = kb[kb > 0][None, :]     # keep = keep[keep.gt(0)].unsqueeze(0)
        kb = kb[:keep_k]             # keep[:self.keep_k] (slices dim 0 of size 1)
        keep_list.append(kb)
    keep_tensor = np.concatenate(keep_list, axis=0)
    # TODO(synk): the module's debug print of the result is omitted.
    return [np.concatenate([keep_tensor, np.zeros_like(keep_tensor)],
                           axis=0).astype(np.int32)]


# --------------------------- numpy reference ---------------------------------
def _reference_keep_slots(pred_logits, pred_segments, overlap, top_k):
    """Pure-numpy transcription of the torch per-batch greedy loop."""
    pred_logits = np.asarray(pred_logits, np.float32)
    pred_segments = np.asarray(pred_segments, np.float32)
    B, Q, _ = pred_logits.shape
    keep_all = np.zeros((B, Q), np.int64)
    for b in range(B):
        lg = pred_logits[b]
        e = np.exp(lg - lg.max(-1, keepdims=True))
        p = e / e.sum(-1, keepdims=True)
        scores = p.max(-1)
        boxes = pred_segments[b]
        keep = keep_all[b]
        x1, x2 = boxes[:, 0], boxes[:, 1]
        idx = np.argsort(scores, kind="stable")[-top_k:]
        count = 0
        while idx.size > 0:
            i = idx[-1]
            keep[count] = i
            count += 1
            if idx.size == 1:
                break
            idx = idx[:-1]
            xx1 = np.maximum(x1[idx], x1[i])
            xx2 = np.minimum(x2[idx], x2[i])
            w = np.maximum(xx2 - xx1, 0.0)
            idx = idx[w <= overlap]
    return keep_all


def _reference_forward(pred_logits, pred_segments, overlap, top_k, keep_k):
    keep_all = _reference_keep_slots(pred_logits, pred_segments, overlap, top_k)
    keep_list = []
    for b in range(keep_all.shape[0]):
        kb = keep_all[b]
        kb = kb[kb > 0][None, :]
        kb = kb[:keep_k]
        keep_list.append(kb)
    keep_tensor = np.concatenate(keep_list, axis=0)
    return [np.concatenate([keep_tensor, np.zeros_like(keep_tensor)],
                           axis=0).astype(np.int32)]


if __name__ == "__main__":
    key = jax.random.PRNGKey(0)
    k1, k2, k3, k4 = jax.random.split(key, 4)

    # --- Test 1: B=2, Q=8, C=5; clustered deterministic segments ------------
    B, Q, C = 2, 8, 5
    pred_logits = jax.random.normal(k1, (B, Q, C), dtype=jnp.float32)
    seg = jnp.array(
        [[0.00, 0.10],
         [0.20, 0.35], [0.25, 0.40], [0.30, 0.45],
         [0.60, 0.75], [0.65, 0.80], [0.70, 0.85],
         [0.90, 1.00]], dtype=jnp.float32)
    pred_segments = jnp.broadcast_to(seg, (B, Q, 2))
    outputs = {"pred_logits": pred_logits, "pred_segments": pred_segments}

    result = nms_v1_forward(outputs)          # kernel path (blocks on result)
    ref = _reference_forward(pred_logits, pred_segments, OVERLAP, TOP_K, KEEP_K)
    np.testing.assert_array_equal(result[0], ref[0])

    # --- Test 2: B=3, Q=10, C=4; exercises batch-row & query-lane padding ---
    B2, Q2, C2 = 3, 10, 4
    pred_logits2 = jax.random.normal(k2, (B2, Q2, C2), dtype=jnp.float32)
    seg2 = jnp.array(
        [[0.00, 0.08],
         [0.10, 0.22], [0.15, 0.27], [0.20, 0.32],
         [0.40, 0.52], [0.45, 0.57],
         [0.60, 0.72], [0.65, 0.77], [0.70, 0.82],
         [0.90, 1.00]], dtype=jnp.float32)
    pred_segments2 = jnp.broadcast_to(seg2, (B2, Q2, 2))
    outputs2 = {"pred_logits": pred_logits2, "pred_segments": pred_segments2}

    result2 = nms_v1_forward(outputs2)
    ref2 = _reference_forward(pred_logits2, pred_segments2, OVERLAP, TOP_K, KEEP_K)
    np.testing.assert_array_equal(result2[0], ref2[0])

    # --- Test 3: B=20, Q=100 (module's num_queries), C=5; random segments ---
    # Exercises BT>8, multi-step grid, padded batch rows & query lanes.
    # Compared at the keep-slot level (per-batch kept counts differ, so the
    # ragged concat of the full forward would not be well-defined).
    B3, Q3, C3 = 20, 100, 5
    pred_logits3 = jax.random.normal(k3, (B3, Q3, C3), dtype=jnp.float32)
    centers = jax.random.uniform(k4, (B3, Q3), minval=0.05, maxval=0.95)
    widths = jax.random.uniform(jax.random.fold_in(k4, 1), (B3, Q3),
                                minval=0.01, maxval=0.2)
    pred_segments3 = jnp.stack([centers - widths / 2, centers + widths / 2], axis=-1)

    keep3 = np.asarray(jax.block_until_ready(
        nms_keep_slots(pred_logits3, pred_segments3)))
    ref3 = _reference_keep_slots(pred_logits3, pred_segments3, OVERLAP, TOP_K)
    np.testing.assert_array_equal(keep3, ref3)

    print("KERNEL_OK")
</pallas_src>

<mosaic_0001>
module attributes {stable_mosaic.version = 11 : i64} {
  func.func @_nms_kernel(%arg0: i32, %arg1: memref<8x128xf32, #tpu.memory_space<vmem>>, %arg2: memref<8x128xf32, #tpu.memory_space<vmem>>, %arg3: memref<8x128xf32, #tpu.memory_space<vmem>>, %arg4: memref<8x128xi32, #tpu.memory_space<vmem>>) attributes {dimension_semantics = [#tpu.dimension_semantics<parallel>], iteration_bounds = array<i64: 1>, scalar_prefetch = 0 : i64, scratch_operands = 0 : i64, tpu.core_type = #tpu.core_type<tc>, window_params = [{transform_indices = @transform_0, window_bounds = array<i64: 8, 128>}, {transform_indices = @transform_1, window_bounds = array<i64: 8, 128>}, {transform_indices = @transform_2, window_bounds = array<i64: 8, 128>}, {transform_indices = @transform_3, window_bounds = array<i64: 8, 128>}]} {
    %0 = tpu.iota {dimensions = array<i32: 1>} : vector<8x128xi32>
    %1 = tpu.iota {dimensions = array<i32: 0>} : vector<8x1xi32>
    %c8_i32 = arith.constant 8 : i32
    %2 = arith.muli %arg0, %c8_i32 : i32
    %3 = vector.broadcast %2 : i32 to vector<8x1xi32>
    %4 = arith.addi %3, %1 : vector<8x1xi32>
    %c2_i32 = arith.constant 2 : i32
    %5 = vector.broadcast %c2_i32 : i32 to vector<8x1xi32>
    %6 = arith.cmpi slt, %4, %5 : vector<8x1xi32>
    %c8_i32_0 = arith.constant 8 : i32
    %7 = vector.broadcast %c8_i32_0 : i32 to vector<8x128xi32>
    %8 = arith.cmpi slt, %0, %7 : vector<8x128xi32>
    %9 = vector.broadcast %6 : vector<8x1xi1> to vector<8x128xi1>
    %10 = arith.andi %8, %9 : vector<8x128xi1>
    %c0 = arith.constant 0 : index
    %c0_1 = arith.constant 0 : index
    %11 = vector.load %arg1[%c0, %c0_1] : memref<8x128xf32, #tpu.memory_space<vmem>>, vector<8x128xf32>
    %cst = arith.constant 0xFF800000 : f32
    %12 = vector.broadcast %cst : f32 to vector<8x128xf32>
    %13 = arith.select %10, %11, %12 : vector<8x128xi1>, vector<8x128xf32>
    %c0_2 = arith.constant 0 : index
    %c0_3 = arith.constant 0 : index
    %14 = vector.load %arg2[%c0_2, %c0_3] : memref<8x128xf32, #tpu.memory_space<vmem>>, vector<8x128xf32>
    %c0_4 = arith.constant 0 : index
    %c0_5 = arith.constant 0 : index
    %15 = vector.load %arg3[%c0_4, %c0_5] : memref<8x128xf32, #tpu.memory_space<vmem>>, vector<8x128xf32>
    %16 = vector.shape_cast %14 : vector<8x128xf32> to vector<1x8x128xf32>
    %17 = vector.shape_cast %15 : vector<8x128xf32> to vector<1x8x128xf32>
    %18 = tpu.concatenate %16, %17 in 0 : vector<1x8x128xf32>, vector<1x8x128xf32> -> vector<2x8x128xf32>
    %c0_i32 = arith.constant 0 : i32
    %19 = vector.broadcast %c0_i32 : i32 to vector<8x128xi32>
    %c0_i32_6 = arith.constant 0 : i32
    %20 = vector.broadcast %c0_i32_6 : i32 to vector<8x1xi32>
    %cst_7 = arith.constant 0xFF800000 : f32
    %cst_8 = arith.constant 0.000000e+00 : f32
    %c0_i32_9 = arith.constant 0 : i32
    %c1_i32 = arith.constant 1 : i32
    %21:5 = scf.while (%arg5 = %c0_i32_9, %arg6 = %c1_i32, %arg7 = %13, %arg8 = %19, %arg9 = %20) : (i32, i32, vector<8x128xf32>, vector<8x128xi32>, vector<8x1xi32>) -> (i32, i32, vector<8x128xf32>, vector<8x128xi32>, vector<8x1xi32>) {
      %c0_i32_12 = arith.constant 0 : i32
      %23 = arith.cmpi sgt, %arg6, %c0_i32_12 : i32
      %c8_i32_13 = arith.constant 8 : i32
      %24 = arith.cmpi slt, %arg5, %c8_i32_13 : i32
      %25 = arith.andi %23, %24 : i1
      scf.condition(%25) %arg5, %arg6, %arg7, %arg8, %arg9 : i32, i32, vector<8x128xf32>, vector<8x128xi32>, vector<8x1xi32>
    } do {
    ^bb0(%arg5: i32, %arg6: i32, %arg7: vector<8x128xf32>, %arg8: vector<8x128xi32>, %arg9: vector<8x1xi32>):
      %cst_12 = arith.constant dense<0xFF800000> : vector<8xf32>
      %23 = vector.multi_reduction <maximumf>, %arg7, %cst_12 [1] : vector<8x128xf32> to vector<8xf32>
      %24 = vector.shape_cast %23 : vector<8xf32> to vector<8x1xf32>
      %25 = vector.broadcast %cst_7 : f32 to vector<8x1xf32>
      %26 = arith.cmpf ogt, %24, %25 : vector<8x1xf32>
      %27 = vector.broadcast %24 : vector<8x1xf32> to vector<8x128xf32>
      %28 = arith.cmpf oeq, %arg7, %27 : vector<8x128xf32>
      %c-1_i32 = arith.constant -1 : i32
      %29 = vector.broadcast %c-1_i32 : i32 to vector<8x128xi32>
      %30 = arith.select %28, %0, %29 : vector<8x128xi1>, vector<8x128xi32>
      %cst_13 = arith.constant dense<-2147483648> : vector<8xi32>
      %31 = vector.multi_reduction <maxsi>, %30, %cst_13 [1] : vector<8x128xi32> to vector<8xi32>
      %32 = vector.shape_cast %31 : vector<8xi32> to vector<8x1xi32>
      %33 = vector.broadcast %32 : vector<8x1xi32> to vector<8x128xi32>
      %34 = arith.cmpi eq, %0, %33 : vector<8x128xi32>
      %35 = vector.shape_cast %34 : vector<8x128xi1> to vector<1x8x128xi1>
      %36 = vector.shape_cast %35 : vector<1x8x128xi1> to vector<1x8x128xi1>
      %37 = vector.broadcast %36 : vector<1x8x128xi1> to vector<2x8x128xi1>
      %38 = vector.broadcast %cst_7 : f32 to vector<2x8x128xf32>
      %39 = arith.select %37, %18, %38 : vector<2x8x128xi1>, vector<2x8x128xf32>
      %cst_14 = arith.constant dense<0xFF800000> : vector<2x8xf32>
      %40 = vector.multi_reduction <maximumf>, %39, %cst_14 [2] : vector<2x8x128xf32> to vector<2x8xf32>
      %41 = vector.shape_cast %40 : vector<2x8xf32> to vector<2x8x1xf32>
      %42 = vector.extract_strided_slice %41 {offsets = [0, 0, 0], sizes = [1, 8, 1], strides = [1, 1, 1]} : vector<2x8x1xf32> to vector<1x8x1xf32>
      %43 = vector.shape_cast %42 : vector<1x8x1xf32> to vector<8x1xf32>
      %44 = vector.extract_strided_slice %41 {offsets = [1, 0, 0], sizes = [1, 8, 1], strides = [1, 1, 1]} : vector<2x8x1xf32> to vector<1x8x1xf32>
      %45 = vector.shape_cast %44 : vector<1x8x1xf32> to vector<8x1xf32>
      %46 = vector.broadcast %45 : vector<8x1xf32> to vector<8x128xf32>
      %47 = arith.minimumf %15, %46 : vector<8x128xf32>
      %48 = vector.broadcast %43 : vector<8x1xf32> to vector<8x128xf32>
      %49 = arith.maximumf %14, %48 : vector<8x128xf32>
      %50 = arith.subf %47, %49 : vector<8x128xf32>
      %cst_15 = arith.constant 0.000000e+00 : f32
      %51 = vector.broadcast %cst_15 : f32 to vector<8x128xf32>
      %52 = arith.maximumf %50, %51 : vector<8x128xf32>
      %53 = vector.broadcast %cst_8 : f32 to vector<8x128xf32>
      %54 = arith.cmpf ogt, %52, %53 : vector<8x128xf32>
      %55 = arith.ori %54, %34 : vector<8x128xi1>
      %56 = vector.broadcast %26 : vector<8x1xi1> to vector<8x128xi1>
      %57 = arith.andi %55, %56 : vector<8x128xi1>
      %58 = vector.broadcast %cst_7 : f32 to vector<8x128xf32>
      %59 = arith.select %57, %58, %arg7 : vector<8x128xi1>, vector<8x128xf32>
      %60 = vector.broadcast %arg9 : vector<8x1xi32> to vector<8x128xi32>
      %61 = arith.cmpi eq, %0, %60 : vector<8x128xi32>
      %62 = vector.broadcast %26 : vector<8x1xi1> to vector<8x128xi1>
      %63 = arith.andi %61, %62 : vector<8x128xi1>
      %64 = vector.shape_cast %32 : vector<8x1xi32> to vector<8x1xi32>
      %65 = vector.broadcast %64 : vector<8x1xi32> to vector<8x128xi32>
      %66 = arith.select %63, %65, %arg8 : vector<8x128xi1>, vector<8x128xi32>
      %67 = arith.extui %26 : vector<8x1xi1> to vector<8x1xi32>
      %68 = arith.addi %arg9, %67 : vector<8x1xi32>
      %cst_16 = arith.constant dense<0xFF800000> : vector<8xf32>
      %69 = vector.multi_reduction <maximumf>, %59, %cst_16 [1] : vector<8x128xf32> to vector<8xf32>
      %70 = vector.shape_cast %69 : vector<8xf32> to vector<8x1xf32>
      %71 = vector.broadcast %cst_7 : f32 to vector<8x1xf32>
      %72 = arith.cmpf ogt, %70, %71 : vector<8x1xf32>
      %73 = vector.broadcast %70 : vector<8x1xf32> to vector<8x128xf32>
      %74 = arith.cmpf oeq, %59, %73 : vector<8x128xf32>
      %c-1_i32_17 = arith.constant -1 : i32
      %75 = vector.broadcast %c-1_i32_17 : i32 to vector<8x128xi32>
      %76 = arith.select %74, %0, %75 : vector<8x128xi1>, vector<8x128xi32>
      %cst_18 = arith.constant dense<-2147483648> : vector<8xi32>
      %77 = vector.multi_reduction <maxsi>, %76, %cst_18 [1] : vector<8x128xi32> to vector<8xi32>
      %78 = vector.shape_cast %77 : vector<8xi32> to vector<8x1xi32>
      %79 = vector.broadcast %78 : vector<8x1xi32> to vector<8x128xi32>
      %80 = arith.cmpi eq, %0, %79 : vector<8x128xi32>
      %81 = vector.shape_cast %80 : vector<8x128xi1> to vector<1x8x128xi1>
      %82 = vector.shape_cast %81 : vector<1x8x128xi1> to vector<1x8x128xi1>
      %83 = vector.broadcast %82 : vector<1x8x128xi1> to vector<2x8x128xi1>
      %84 = vector.broadcast %cst_7 : f32 to vector<2x8x128xf32>
      %85 = arith.select %83, %18, %84 : vector<2x8x128xi1>, vector<2x8x128xf32>
      %cst_19 = arith.constant dense<0xFF800000> : vector<2x8xf32>
      %86 = vector.multi_reduction <maximumf>, %85, %cst_19 [2] : vector<2x8x128xf32> to vector<2x8xf32>
      %87 = vector.shape_cast %86 : vector<2x8xf32> to vector<2x8x1xf32>
      %88 = vector.extract_strided_slice %87 {offsets = [0, 0, 0], sizes = [1, 8, 1], strides = [1, 1, 1]} : vector<2x8x1xf32> to vector<1x8x1xf32>
      %89 = vector.shape_cast %88 : vector<1x8x1xf32> to vector<8x1xf32>
      %90 = vector.extract_strided_slice %87 {offsets = [1, 0, 0], sizes = [1, 8, 1], strides = [1, 1, 1]} : vector<2x8x1xf32> to vector<1x8x1xf32>
      %91 = vector.shape_cast %90 : vector<1x8x1xf32> to vector<8x1xf32>
      %92 = vector.broadcast %91 : vector<8x1xf32> to vector<8x128xf32>
      %93 = arith.minimumf %15, %92 : vector<8x128xf32>
      %94 = vector.broadcast %89 : vector<8x1xf32> to vector<8x128xf32>
      %95 = arith.maximumf %14, %94 : vector<8x128xf32>
      %96 = arith.subf %93, %95 : vector<8x128xf32>
      %cst_20 = arith.constant 0.000000e+00 : f32
      %97 = vector.broadcast %cst_20 : f32 to vector<8x128xf32>
      %98 = arith.maximumf %96, %97 : vector<8x128xf32>
      %99 = vector.broadcast %cst_8 : f32 to vector<8x128xf32>
      %100 = arith.cmpf ogt, %98, %99 : vector<8x128xf32>
      %101 = arith.ori %100, %80 : vector<8x128xi1>
      %102 = vector.broadcast %72 : vector<8x1xi1> to vector<8x128xi1>
      %103 = arith.andi %101, %102 : vector<8x128xi1>
      %104 = vector.broadcast %cst_7 : f32 to vector<8x128xf32>
      %105 = arith.select %103, %104, %59 : vector<8x128xi1>, vector<8x128xf32>
      %106 = vector.broadcast %68 : vector<8x1xi32> to vector<8x128xi32>
      %107 = arith.cmpi eq, %0, %106 : vector<8x128xi32>
      %108 = vector.broadcast %72 : vector<8x1xi1> to vector<8x128xi1>
      %109 = arith.andi %107, %108 : vector<8x128xi1>
      %110 = vector.shape_cast %78 : vector<8x1xi32> to vector<8x1xi32>
      %111 = vector.broadcast %110 : vector<8x1xi32> to vector<8x128xi32>
      %112 = arith.select %109, %111, %66 : vector<8x128xi1>, vector<8x128xi32>
      %113 = arith.extui %72 : vector<8x1xi1> to vector<8x1xi32>
      %114 = arith.addi %68, %113 : vector<8x1xi32>
      %cst_21 = arith.constant dense<0xFF800000> : vector<8xf32>
      %115 = vector.multi_reduction <maximumf>, %105, %cst_21 [1] : vector<8x128xf32> to vector<8xf32>
      %116 = vector.shape_cast %115 : vector<8xf32> to vector<8x1xf32>
      %117 = vector.broadcast %cst_7 : f32 to vector<8x1xf32>
      %118 = arith.cmpf ogt, %116, %117 : vector<8x1xf32>
      %119 = vector.broadcast %116 : vector<8x1xf32> to vector<8x128xf32>
      %120 = arith.cmpf oeq, %105, %119 : vector<8x128xf32>
      %c-1_i32_22 = arith.constant -1 : i32
      %121 = vector.broadcast %c-1_i32_22 : i32 to vector<8x128xi32>
      %122 = arith.select %120, %0, %121 : vector<8x128xi1>, vector<8x128xi32>
      %cst_23 = arith.constant dense<-2147483648> : vector<8xi32>
      %123 = vector.multi_reduction <maxsi>, %122, %cst_23 [1] : vector<8x128xi32> to vector<8xi32>
      %124 = vector.shape_cast %123 : vector<8xi32> to vector<8x1xi32>
      %125 = vector.broadcast %124 : vector<8x1xi32> to vector<8x128xi32>
      %126 = arith.cmpi eq, %0, %125 : vector<8x128xi32>
      %127 = vector.shape_cast %126 : vector<8x128xi1> to vector<1x8x128xi1>
      %128 = vector.shape_cast %127 : vector<1x8x128xi1> to vector<1x8x128xi1>
      %129 = vector.broadcast %128 : vector<1x8x128xi1> to vector<2x8x128xi1>
      %130 = vector.broadcast %cst_7 : f32 to vector<2x8x128xf32>
      %131 = arith.select %129, %18, %130 : vector<2x8x128xi1>, vector<2x8x128xf32>
      %cst_24 = arith.constant dense<0xFF800000> : vector<2x8xf32>
      %132 = vector.multi_reduction <maximumf>, %131, %cst_24 [2] : vector<2x8x128xf32> to vector<2x8xf32>
      %133 = vector.shape_cast %132 : vector<2x8xf32> to vector<2x8x1xf32>
      %134 = vector.extract_strided_slice %133 {offsets = [0, 0, 0], sizes = [1, 8, 1], strides = [1, 1, 1]} : vector<2x8x1xf32> to vector<1x8x1xf32>
      %135 = vector.shape_cast %134 : vector<1x8x1xf32> to vector<8x1xf32>
      %136 = vector.extract_strided_slice %133 {offsets = [1, 0, 0], sizes = [1, 8, 1], strides = [1, 1, 1]} : vector<2x8x1xf32> to vector<1x8x1xf32>
      %137 = vector.shape_cast %136 : vector<1x8x1xf32> to vector<8x1xf32>
      %138 = vector.broadcast %137 : vector<8x1xf32> to vector<8x128xf32>
      %139 = arith.minimumf %15, %138 : vector<8x128xf32>
      %140 = vector.broadcast %135 : vector<8x1xf32> to vector<8x128xf32>
      %141 = arith.maximumf %14, %140 : vector<8x128xf32>
      %142 = arith.subf %139, %141 : vector<8x128xf32>
      %cst_25 = arith.constant 0.000000e+00 : f32
      %143 = vector.broadcast %cst_25 : f32 to vector<8x128xf32>
      %144 = arith.maximumf %142, %143 : vector<8x128xf32>
      %145 = vector.broadcast %cst_8 : f32 to vector<8x128xf32>
      %146 = arith.cmpf ogt, %144, %145 : vector<8x128xf32>
      %147 = arith.ori %146, %126 : vector<8x128xi1>
      %148 = vector.broadcast %118 : vector<8x1xi1> to vector<8x128xi1>
      %149 = arith.andi %147, %148 : vector<8x128xi1>
      %150 = vector.broadcast %cst_7 : f32 to vector<8x128xf32>
      %151 = arith.select %149, %150, %105 : vector<8x128xi1>, vector<8x128xf32>
      %152 = vector.broadcast %114 : vector<8x1xi32> to vector<8x128xi32>
      %153 = arith.cmpi eq, %0, %152 : vector<8x128xi32>
      %154 = vector.broadcast %118 : vector<8x1xi1> to vector<8x128xi1>
      %155 = arith.andi %153, %154 : vector<8x128xi1>
      %156 = vector.shape_cast %124 : vector<8x1xi32> to vector<8x1xi32>
      %157 = vector.broadcast %156 : vector<8x1xi32> to vector<8x128xi32>
      %158 = arith.select %155, %157, %112 : vector<8x128xi1>, vector<8x128xi32>
      %159 = arith.extui %118 : vector<8x1xi1> to vector<8x1xi32>
      %160 = arith.addi %114, %159 : vector<8x1xi32>
      %cst_26 = arith.constant dense<0xFF800000> : vector<8xf32>
      %161 = vector.multi_reduction <maximumf>, %151, %cst_26 [1] : vector<8x128xf32> to vector<8xf32>
      %162 = vector.shape_cast %161 : vector<8xf32> to vector<8x1xf32>
      %163 = vector.broadcast %cst_7 : f32 to vector<8x1xf32>
      %164 = arith.cmpf ogt, %162, %163 : vector<8x1xf32>
      %165 = vector.broadcast %162 : vector<8x1xf32> to vector<8x128xf32>
      %166 = arith.cmpf oeq, %151, %165 : vector<8x128xf32>
      %c-1_i32_27 = arith.constant -1 : i32
      %167 = vector.broadcast %c-1_i32_27 : i32 to vector<8x128xi32>
      %168 = arith.select %166, %0, %167 : vector<8x128xi1>, vector<8x128xi32>
      %cst_28 = arith.constant dense<-2147483648> : vector<8xi32>
      %169 = vector.multi_reduction <maxsi>, %168, %cst_28 [1] : vector<8x128xi32> to vector<8xi32>
      %170 = vector.shape_cast %169 : vector<8xi32> to vector<8x1xi32>
      %171 = vector.broadcast %170 : vector<8x1xi32> to vector<8x128xi32>
      %172 = arith.cmpi eq, %0, %171 : vector<8x128xi32>
      %173 = vector.shape_cast %172 : vector<8x128xi1> to vector<1x8x128xi1>
      %174 = vector.shape_cast %173 : vector<1x8x128xi1> to vector<1x8x128xi1>
      %175 = vector.broadcast %174 : vector<1x8x128xi1> to vector<2x8x128xi1>
      %176 = vector.broadcast %cst_7 : f32 to vector<2x8x128xf32>
      %177 = arith.select %175, %18, %176 : vector<2x8x128xi1>, vector<2x8x128xf32>
      %cst_29 = arith.constant dense<0xFF800000> : vector<2x8xf32>
      %178 = vector.multi_reduction <maximumf>, %177, %cst_29 [2] : vector<2x8x128xf32> to vector<2x8xf32>
      %179 = vector.shape_cast %178 : vector<2x8xf32> to vector<2x8x1xf32>
      %180 = vector.extract_strided_slice %179 {offsets = [0, 0, 0], sizes = [1, 8, 1], strides = [1, 1, 1]} : vector<2x8x1xf32> to vector<1x8x1xf32>
      %181 = vector.shape_cast %180 : vector<1x8x1xf32> to vector<8x1xf32>
      %182 = vector.extract_strided_slice %179 {offsets = [1, 0, 0], sizes = [1, 8, 1], strides = [1, 1, 1]} : vector<2x8x1xf32> to vector<1x8x1xf32>
      %183 = vector.shape_cast %182 : vector<1x8x1xf32> to vector<8x1xf32>
      %184 = vector.broadcast %183 : vector<8x1xf32> to vector<8x128xf32>
      %185 = arith.minimumf %15, %184 : vector<8x128xf32>
      %186 = vector.broadcast %181 : vector<8x1xf32> to vector<8x128xf32>
      %187 = arith.maximumf %14, %186 : vector<8x128xf32>
      %188 = arith.subf %185, %187 : vector<8x128xf32>
      %cst_30 = arith.constant 0.000000e+00 : f32
      %189 = vector.broadcast %cst_30 : f32 to vector<8x128xf32>
      %190 = arith.maximumf %188, %189 : vector<8x128xf32>
      %191 = vector.broadcast %cst_8 : f32 to vector<8x128xf32>
      %192 = arith.cmpf ogt, %190, %191 : vector<8x128xf32>
      %193 = arith.ori %192, %172 : vector<8x128xi1>
      %194 = vector.broadcast %164 : vector<8x1xi1> to vector<8x128xi1>
      %195 = arith.andi %193, %194 : vector<8x128xi1>
      %196 = vector.broadcast %cst_7 : f32 to vector<8x128xf32>
      %197 = arith.select %195, %196, %151 : vector<8x128xi1>, vector<8x128xf32>
      %198 = vector.broadcast %160 : vector<8x1xi32> to vector<8x128xi32>
      %199 = arith.cmpi eq, %0, %198 : vector<8x128xi32>
      %200 = vector.broadcast %164 : vector<8x1xi1> to vector<8x128xi1>
      %201 = arith.andi %199, %200 : vector<8x128xi1>
      %202 = vector.shape_cast %170 : vector<8x1xi32> to vector<8x1xi32>
      %203 = vector.broadcast %202 : vector<8x1xi32> to vector<8x128xi32>
      %204 = arith.select %201, %203, %158 : vector<8x128xi1>, vector<8x128xi32>
      %205 = arith.extui %164 : vector<8x1xi1> to vector<8x1xi32>
      %206 = arith.addi %160, %205 : vector<8x1xi32>
      %cst_31 = arith.constant 1.000000e+00 : f32
      %cst_32 = arith.constant 0.000000e+00 : f32
      %207 = vector.broadcast %cst_31 : f32 to vector<8x1xf32>
      %208 = vector.broadcast %cst_32 : f32 to vector<8x1xf32>
      %209 = arith.select %164, %207, %208 : vector<8x1xi1>, vector<8x1xf32>
      %210 = vector.shape_cast %209 : vector<8x1xf32> to vector<1x8x1xf32>
      %cst_33 = arith.constant dense<0xFF800000> : vector<1xf32>
      %211 = vector.multi_reduction <maximumf>, %210, %cst_33 [1, 2] : vector<1x8x1xf32> to vector<1xf32>
      %212 = vector.shape_cast %211 : vector<1xf32> to vector<1x1x1xf32>
      %213 = vector.extract %212[0, 0, 0] : f32 from vector<1x1x1xf32>
      %cst_34 = arith.constant 0.000000e+00 : f32
      %214 = arith.cmpf ogt, %213, %cst_34 : f32
      %215 = arith.extui %214 : i1 to i32
      %c4_i32 = arith.constant 4 : i32
      %216 = arith.addi %arg5, %c4_i32 : i32
      scf.yield %216, %215, %197, %204, %206 : i32, i32, vector<8x128xf32>, vector<8x128xi32>, vector<8x1xi32>
    }
    %c0_10 = arith.constant 0 : index
    %c0_11 = arith.constant 0 : index
    %22 = vector.load %arg4[%c0_10, %c0_11] : memref<8x128xi32, #tpu.memory_space<vmem>>, vector<8x128xi32>
    tpu.vector_store %arg4[%c0_10, %c0_11], %21#3 {strides = array<i32>} : memref<8x128xi32, #tpu.memory_space<vmem>>, vector<8x128xi32>,
    return
  }
  func.func @transform_0(%arg0: i32) -> (i32, i32) {
    %c0_i32 = arith.constant 0 : i32
    %c0_i32_0 = arith.constant 0 : i32
    return %arg0, %c0_i32 : i32, i32
  }
  func.func @transform_1(%arg0: i32) -> (i32, i32) {
    %c0_i32 = arith.constant 0 : i32
    %c0_i32_0 = arith.constant 0 : i32
    return %arg0, %c0_i32 : i32, i32
  }
  func.func @transform_2(%arg0: i32) -> (i32, i32) {
    %c0_i32 = arith.constant 0 : i32
    %c0_i32_0 = arith.constant 0 : i32
    return %arg0, %c0_i32 : i32, i32
  }
  func.func @transform_3(%arg0: i32) -> (i32, i32) {
    %c0_i32 = arith.constant 0 : i32
    %c0_i32_0 = arith.constant 0 : i32
    return %arg0, %c0_i32 : i32, i32
  }
}

</mosaic_0001>

<llo_original>
// kernel: nms_keep_slots.1
$region0: #{nms_keep_slots.1}
  #allocation0 [shape = 'u32[]', space=smem, size = 0x4, offset = 0x4, fixed_abs, tag = 'smem constant byte address 0x4 - core index']
  #allocation1 [shape = 'u32[144,128]{1,0:T(1,128)}', space=vmem, size = 0x12000, scoped, tag = 'internal scratch']
  %s0 = inlined_call_operand.vmem [shape: f32[8,128], index: 0, kind: input, shape index: {}]
  %s1 = inlined_call_operand.vmem [shape: f32[8,128], index: 1, kind: input, shape index: {}]
  %s2 = inlined_call_operand.vmem [shape: f32[8,128], index: 2, kind: input, shape index: {}]
  %s3 = inlined_call_operand.vmem [shape: s32[8,128], index: 3, kind: output, shape index: {}]
  %s4 = sld [smem:[#allocation0]]
  $region29: #{nms_keep_slots.1} parent=0
    _
  %s6 = ssub.s32 1, %s4
  %s7 = scalar_select 0, %s6, %s4
  // Predicated region
  $region2: #{nms_keep_slots.1} parent=0 // pred_check
    _
  $region3: #{nms_keep_slots.1} parent=0 // pred_check_branch
    %9 = sbr.rel (0) target = $region5
  $region4: #{nms_keep_slots.1} parent=0 // pred_region
    _
  $region5: #{nms_keep_slots.1} parent=0 // pred_fallthru
    _
  // Predicated region
  $region6: #{nms_keep_slots.1} parent=0 // pred_check
    _
  $region7: #{nms_keep_slots.1} parent=0 // pred_check_branch
    %11 = sbr.rel (0) target = $region9
  $region8: #{nms_keep_slots.1} parent=0 // pred_region
    _
  $region9: #{nms_keep_slots.1} parent=0 // pred_fallthru
    _
  // Predicated region
  $region10: #{nms_keep_slots.1} parent=0 // pred_check
    _
  $region11: #{nms_keep_slots.1} parent=0 // pred_check_branch
    %13 = sbr.rel (0) target = $region13
  $region12: #{nms_keep_slots.1} parent=0 // pred_region
    _
  $region13: #{nms_keep_slots.1} parent=0 // pred_fallthru
    _
  %v14 = vlaneseq
  %v15 = vand.u32 %v14, 127
  %v16 = vlaneseq
  %v17 = vshrl.u32 %v16, 7
  %s18 = smul.u32 0, 8
  %v19 = vstv %s18
  %v20 = vadd.s32 %v19, %v17
  %vm21 = vcmp.lt.s32.totalorder %v20, 2
  %vm22 = vcmp.lt.s32.totalorder %v15, 8
  %v23 = vsel %vm21, 1, 0
  %vm24 = vcmp.eq.s32.totalorder %v23, 1
  %vm25 = vmand %vm22, %vm24
  %v26 = vld [vmem:[%s0] sm:$0xff]
  %v27 = vsel %vm25, %v26, -inf
  %v28 = vld [vmem:[%s1] sm:$0xff]
  %v29 = vld [vmem:[%s2] sm:$0xff]
  // While loop
  $region14: #{nms_keep_slots.1} parent=0 // loop_pre_header
    _
  $region15: #{nms_keep_slots.1} parent=0 // loop_header
    %s31 = sphi 0, %s220
    %s32 = sphi 1, %s219
    %v33 = vphi %v27, %v205
    %v34 = vphi 0, %v208
    %v35 = vphi 0, %v209
    %p36 = scmp.gt.s32.totalorder %s32, 0
    %p37 = scmp.lt.s32.totalorder %s31, 8
    %p38 = pnand %p36, %p37
    %p39 = pneg %p38
  $region16: #{nms_keep_slots.1} parent=0 // loop_header_branch
    %41 = sbr.rel (%p38) target = $region20
  $region17: #{nms_keep_slots.1} parent=0 // loop_body
    %42 = vmax.xlane.f32.xlu0 %v33
    %v43 = vpop.xlane.xlu0 %42
    %vm44 = vcmp.gt.f32.partialorder %v43, -inf
    %vm45 = vcmp.eq.f32.partialorder %v33, %v43
    %v46 = vsel %vm45, %v15, 4294967295
    %v47 = vand.u32 %v46, 65535
    %v48 = vshra.s32 %v46, 16
    %v49 = vcvt.s32.f32 %v47
    %v50 = vcvt.s32.f32 %v48
    %51 = vmax.xlane.f32.xlu0 %v50
    %v52 = vpop.xlane.xlu0 %51
    %vm53 = vcmp.eq.f32.partialorder %v50, %v52
    %v54 = vsel %vm53, %v49, -inf
    %55 = vmax.xlane.f32.xlu0 %v54
    %v56 = vpop.xlane.xlu0 %55
    %v57 = vcvt.f32.s32 %v56
    %v58 = vcvt.f32.s32 %v52
    %v59 = vshll.u32 %v58, 16
    %v60 = vadd.s32 %v59, %v57
    %vm61 = vcmp.eq.s32.totalorder %v15, %v60
    %v62 = vsel %vm61, 1, 0
    %vm63 = vcmp.eq.s32.totalorder %v62, 1
    %v64 = vsel %vm63, %v28, -inf
    %v65 = vsel %vm63, %v29, -inf
    %66 = vmax.xlane.f32.xlu0 %v64
    %v67 = vpop.xlane.xlu0 %66
    %68 = vmax.xlane.f32.xlu0 %v65
    %v69 = vpop.xlane.xlu0 %68
    %v70 = vmin.f32 %v29, %v69
    %v71 = vmax.f32 %v28, %v67
    %v72 = vsub.f32 %v70, %v71
    %v73 = vmax.f32 %v72, 0.0
    %vm74 = vcmp.gt.f32.partialorder %v73, 0.0
    %vm75 = vmor %vm74, %vm61
    %v76 = vsel %vm44, 1, 0
    %vm77 = vcmp.eq.s32.totalorder %v76, 1
    %vm78 = vmand %vm75, %vm77
    %v79 = vsel %vm78, -inf, %v33
    %vm80 = vcmp.eq.s32.totalorder %v15, %v35
    %vm81 = vmand %vm80, %vm77
    %v82 = vsel %vm81, %v60, %v34
    %v83 = vadd.s32 %v35, %v76
    %84 = vmax.xlane.f32.xlu0 %v79
    %v85 = vpop.xlane.xlu0 %84
    %vm86 = vcmp.gt.f32.partialorder %v85, -inf
    %vm87 = vcmp.eq.f32.partialorder %v79, %v85
    %v88 = vsel %vm87, %v15, 4294967295
    %v89 = vand.u32 %v88, 65535
    %v90 = vshra.s32 %v88, 16
    %v91 = vcvt.s32.f32 %v89
    %v92 = vcvt.s32.f32 %v90
    %93 = vmax.xlane.f32.xlu0 %v92
    %v94 = vpop.xlane.xlu0 %93
    %vm95 = vcmp.eq.f32.partialorder %v92, %v94
    %v96 = vsel %vm95, %v91, -inf
    %97 = vmax.xlane.f32.xlu0 %v96
    %v98 = vpop.xlane.xlu0 %97
    %v99 = vcvt.f32.s32 %v98
    %v100 = vcvt.f32.s32 %v94
    %v101 = vshll.u32 %v100, 16
    %v102 = vadd.s32 %v101, %v99
    %vm103 = vcmp.eq.s32.totalorder %v15, %v102
    %v104 = vsel %vm103, 1, 0
    %vm105 = vcmp.eq.s32.totalorder %v104, 1
    %v106 = vsel %vm105, %v28, -inf
    %v107 = vsel %vm105, %v29, -inf
    %108 = vmax.xlane.f32.xlu0 %v106
    %v109 = vpop.xlane.xlu0 %108
    %110 = vmax.xlane.f32.xlu0 %v107
    %v111 = vpop.xlane.xlu0 %110
    %v112 = vmin.f32 %v29, %v111
    %v113 = vmax.f32 %v28, %v109
    %v114 = vsub.f32 %v112, %v113
    %v115 = vmax.f32 %v114, 0.0
    %vm116 = vcmp.gt.f32.partialorder %v115, 0.0
    %vm117 = vmor %vm116, %vm103
    %v118 = vsel %vm86, 1, 0
    %vm119 = vcmp.eq.s32.totalorder %v118, 1
    %vm120 = vmand %vm117, %vm119
    %v121 = vsel %vm120, -inf, %v79
    %vm122 = vcmp.eq.s32.totalorder %v15, %v83
    %vm123 = vmand %vm122, %vm119
    %v124 = vsel %vm123, %v102, %v82
    %v125 = vadd.s32 %v83, %v118
    %126 = vmax.xlane.f32.xlu0 %v121
    %v127 = vpop.xlane.xlu0 %126
    %vm128 = vcmp.gt.f32.partialorder %v127, -inf
    %vm129 = vcmp.eq.f32.partialorder %v121, %v127
    %v130 = vsel %vm129, %v15, 4294967295
    %v131 = vand.u32 %v130, 65535
    %v132 = vshra.s32 %v130, 16
    %v133 = vcvt.s32.f32 %v131
    %v134 = vcvt.s32.f32 %v132
    %135 = vmax.xlane.f32.xlu0 %v134
    %v136 = vpop.xlane.xlu0 %135
    %vm137 = vcmp.eq.f32.partialorder %v134, %v136
    %v138 = vsel %vm137, %v133, -inf
    %139 = vmax.xlane.f32.xlu0 %v138
    %v140 = vpop.xlane.xlu0 %139
    %v141 = vcvt.f32.s32 %v140
    %v142 = vcvt.f32.s32 %v136
    %v143 = vshll.u32 %v142, 16
    %v144 = vadd.s32 %v143, %v141
    %vm145 = vcmp.eq.s32.totalorder %v15, %v144
    %v146 = vsel %vm145, 1, 0
    %vm147 = vcmp.eq.s32.totalorder %v146, 1
    %v148 = vsel %vm147, %v28, -inf
    %v149 = vsel %vm147, %v29, -inf
    %150 = vmax.xlane.f32.xlu0 %v148
    %v151 = vpop.xlane.xlu0 %150
    %152 = vmax.xlane.f32.xlu0 %v149
    %v153 = vpop.xlane.xlu0 %152
    %v154 = vmin.f32 %v29, %v153
    %v155 = vmax.f32 %v28, %v151
    %v156 = vsub.f32 %v154, %v155
    %v157 = vmax.f32 %v156, 0.0
    %vm158 = vcmp.gt.f32.partialorder %v157, 0.0
    %vm159 = vmor %vm158, %vm145
    %v160 = vsel %vm128, 1, 0
    %vm161 = vcmp.eq.s32.totalorder %v160, 1
    %vm162 = vmand %vm159, %vm161
    %v163 = vsel %vm162, -inf, %v121
    %vm164 = vcmp.eq.s32.totalorder %v15, %v125
    %vm165 = vmand %vm164, %vm161
    %v166 = vsel %vm165, %v144, %v124
    %v167 = vadd.s32 %v125, %v160
    %168 = vmax.xlane.f32.xlu0 %v163
    %v169 = vpop.xlane.xlu0 %168
    %vm170 = vcmp.gt.f32.partialorder %v169, -inf
    %vm171 = vcmp.eq.f32.partialorder %v163, %v169
    %v172 = vsel %vm171, %v15, 4294967295
    %v173 = vand.u32 %v172, 65535
    %v174 = vshra.s32 %v172, 16
    %v175 = vcvt.s32.f32 %v173
    %v176 = vcvt.s32.f32 %v174
    %177 = vmax.xlane.f32.xlu0 %v176
    %v178 = vpop.xlane.xlu0 %177
    %vm179 = vcmp.eq.f32.partialorder %v176, %v178
    %v180 = vsel %vm179, %v175, -inf
    %181 = vmax.xlane.f32.xlu0 %v180
    %v182 = vpop.xlane.xlu0 %181
    %v183 = vcvt.f32.s32 %v182
    %v184 = vcvt.f32.s32 %v178
    %v185 = vshll.u32 %v184, 16
    %v186 = vadd.s32 %v185, %v183
    %vm187 = vcmp.eq.s32.totalorder %v15, %v186
    %v188 = vsel %vm187, 1, 0
    %vm189 = vcmp.eq.s32.totalorder %v188, 1
    %v190 = vsel %vm189, %v28, -inf
    %v191 = vsel %vm189, %v29, -inf
    %192 = vmax.xlane.f32.xlu0 %v190
    %v193 = vpop.xlane.xlu0 %192
    %194 = vmax.xlane.f32.xlu0 %v191
    %v195 = vpop.xlane.xlu0 %194
    %v196 = vmin.f32 %v29, %v195
    %v197 = vmax.f32 %v28, %v193
    %v198 = vsub.f32 %v196, %v197
    %v199 = vmax.f32 %v198, 0.0
    %vm200 = vcmp.gt.f32.partialorder %v199, 0.0
    %vm201 = vmor %vm200, %vm187
    %v202 = vsel %vm170, 1, 0
    %vm203 = vcmp.eq.s32.totalorder %v202, 1
    %vm204 = vmand %vm201, %vm203
    %v205 = vsel %vm204, -inf, %v163
    %vm206 = vcmp.eq.s32.totalorder %v15, %v167
    %vm207 = vmand %vm206, %vm203
    %v208 = vsel %vm207, %v186, %v166
    %v209 = vadd.s32 %v167, %v202
    %v210 = vsel %vm170, 1.0, 0.0
    %v211 = vrot.slane %v210, 4
    %v212 = vmax.f32 %v210, %v211
    %v213 = vrot.slane %v212, 2
    %v214 = vmax.f32 %v212, %v213
    %v215 = vrot.slane %v214, 1
    %v216 = vmax.f32 %v214, %v215
    %s217 = vtos %v216
    %p218 = scmp.gt.f32.partialorder %s217, 0.0
    %s219 = scalar_select %p218, 1, 0
    %s220 = sadd.s32 %s31, 4
  $region18: #{nms_keep_slots.1} parent=0 // loop_footer
    _
  $region19: #{nms_keep_slots.1} parent=0 // loop_footer_branch
    %30 = sbr.rel target = $region15
  $region20: #{nms_keep_slots.1} parent=0 // loop_exit
    _
  %221 = vst [vmem:[%s3] sm:$0xff] %v34
  // Predicated region
  $region21: #{nms_keep_slots.1} parent=0 // pred_check
    _
  $region22: #{nms_keep_slots.1} parent=0 // pred_check_branch
    %223 = sbr.rel (0) target = $region24
  $region23: #{nms_keep_slots.1} parent=0 // pred_region
    _
  $region24: #{nms_keep_slots.1} parent=0 // pred_fallthru
    _
  // Predicated region
  $region25: #{nms_keep_slots.1} parent=0 // pred_check
    _
  $region26: #{nms_keep_slots.1} parent=0 // pred_check_branch
    %225 = sbr.rel (0) target = $region28
  $region27: #{nms_keep_slots.1} parent=0 // pred_region
    _
  $region28: #{nms_keep_slots.1} parent=0 // pred_fallthru
    _

</llo_original>
